<compile_context>
chip_gen: v5e
topology: v5e:2x2
jax: 0.10.0
libtpu: 0.0.40
codegen_flags: <defaults>
</compile_context>

<pallas_src>
from functools import partial

import jax
import jax.numpy as jnp
from jax.experimental import pallas as pl
from jax.experimental.pallas import tpu as pltpu


def _round_up(v, m):
    return (v + m - 1) // m * m


def _min_sublane(dtype):
    # min second-to-last block dim by element width (f32: 8, bf16: 16, int8: 32)
    return {4: 8, 2: 16, 1: 32}.get(jnp.dtype(dtype).itemsize, 8)


def _vmem_capacity_bytes():
    try:
        return int(pltpu.get_tpu_info().vmem_capacity_bytes)
    except Exception:
        return 64 * 2**20  # conservative default (v7x per-TensorCore)


def ae_kernel(x_ref,
              w1_ref, b1_ref,
              w2_ref, b2_ref,
              wz_ref, bz_ref,
              wd1_ref, bd1_ref,
              wd2_ref, bd2_ref,
              wx_ref, bx_ref,
              xbar_ref, z_ref):
    """Fused AE forward for one batch tile; all weights resident in VMEM."""
    cdt = w1_ref.dtype  # MXU operand / intermediate-activation dtype

    def dense(h, w_ref, b_ref, relu):
        # MXU matmul in the weight dtype (f32 or bf16), f32 accumulation.
        y = jnp.dot(h.astype(w_ref.dtype), w_ref[...],
                    preferred_element_type=jnp.float32)
        y = y + b_ref[...]                       # bias/ReLU stay in f32 (VPU)
        return jnp.maximum(y, 0.0) if relu else y

    x = x_ref[...]
    h = dense(x, w1_ref, b1_ref, relu=True).astype(cdt)    # enc_1 + relu
    h = dense(h, w2_ref, b2_ref, relu=True).astype(cdt)    # enc_2 + relu
    z = dense(h, wz_ref, bz_ref, relu=False)               # z_layer (f32)
    h = dense(z.astype(cdt), wd1_ref, bd1_ref, relu=True).astype(cdt)  # dec_1
    h = dense(h, wd2_ref, bd2_ref, relu=True).astype(cdt)  # dec_2 + relu
    x_bar = dense(h, wx_ref, bx_ref, relu=False)           # x_bar_layer (f32)

    xbar_ref[...] = x_bar.astype(xbar_ref.dtype)
    z_ref[...] = z.astype(z_ref.dtype)


@partial(jax.jit,
         static_argnames=("tile_b", "compute_dtype", "out_dtype",
                          "weight_buffer_count"))
def ae_forward(x, params, *, tile_b=None, compute_dtype=jnp.float32,
               out_dtype=None, weight_buffer_count=1):
    """params: list of (W[in,out], b[1,out]) for the 6 linear layers.

    compute_dtype: dtype of weights / MXU operands / intermediate activations
      (use jnp.bfloat16 on v5e/v6e/v7x for the fast MXU path; f32 accumulation,
      bias and ReLU stay f32 either way).
    out_dtype: dtype of x_bar / z outputs (defaults to x.dtype).
    weight_buffer_count: 1 => single-buffer the resident weights (they have a
      constant block index and are never re-fetched); 2 => default pipelining.
    """
    n, n_input = x.shape
    n_z = params[2][0].shape[1]
    out_dtype = out_dtype if out_dtype is not None else x.dtype

    # --- feature padding: every dim becomes a multiple of 128 (lane-dense). ---
    dims = [n_input] + [w.shape[1] for w, _ in params]      # in,e1,e2,z,d1,d2,out
    pdims = [_round_up(d, 128) for d in dims]

    # --- batch tiling: big tiles to fill the MXU M dim, rounded to the dtype
    # sublane multiple, clamped for tiny batches, and split so grid >= 2 when
    # the batch allows (v7x has 2 TensorCores under "parallel" semantics). ---
    sublane = max(_min_sublane(x.dtype), _min_sublane(out_dtype))
    if tile_b is None:
        tile_b = 512 if jnp.dtype(compute_dtype).itemsize == 2 else 256
    tile_b = max(sublane, _round_up(tile_b, sublane))
    tile_b = min(tile_b, _round_up(max(n, 1), sublane))
    if n >= 2 * 128:
        half = _round_up((n + 1) // 2, sublane)
        tile_b = min(tile_b, max(128, half))
    n_pad = _round_up(n, tile_b)
    grid = (n_pad // tile_b,)

    # --- zero-pad input and parameters (compiled once under jit). ---
    xp = jnp.zeros((n_pad, pdims[0]), x.dtype).at[:n, :n_input].set(x)

    flat = []
    for li, (w, b) in enumerate(params):
        fin, fout = w.shape
        wp = (jnp.zeros((pdims[li], pdims[li + 1]), compute_dtype)
              .at[:fin, :fout].set(w.astype(compute_dtype)))
        bp = (jnp.zeros((1, pdims[li + 1]), jnp.float32)
              .at[:, :fout].set(b.astype(jnp.float32)))
        flat.extend([wp, bp])

    # --- BlockSpecs: weights resident (constant block index); single-buffered
    # when requested so VMEM only holds one copy. ---
    weight_mode = (None if weight_buffer_count == 2
                   else pl.Buffered(buffer_count=weight_buffer_count))

    def full_spec(arr):
        if weight_mode is None:
            return pl.BlockSpec(arr.shape, lambda i: (0, 0))
        return pl.BlockSpec(arr.shape, lambda i: (0, 0),
                            pipeline_mode=weight_mode)

    in_specs = [pl.BlockSpec((tile_b, pdims[0]), lambda i: (i, 0))]
    in_specs += [full_spec(a) for a in flat]

    out_specs = (
        pl.BlockSpec((tile_b, pdims[6]), lambda i: (i, 0)),  # x_bar (lane-dense)
        pl.BlockSpec((tile_b, pdims[3]), lambda i: (i, 0)),  # z     (lane-dense)
    )

    # --- scheduler hint + generation-aware VMEM budget. ---
    flops = 2 * n_pad * sum(pdims[i] * pdims[i + 1] for i in range(6))
    param_bytes = sum(int(a.size) * jnp.dtype(a.dtype).itemsize for a in flat)
    io_tile_bytes = tile_b * (pdims[0] * jnp.dtype(x.dtype).itemsize
                              + (pdims[3] + pdims[6])
                              * jnp.dtype(out_dtype).itemsize)
    bytes_accessed = grid[0] * io_tile_bytes + param_bytes
    act_bytes = 3 * tile_b * max(pdims) * 4       # live f32 intermediates
    vmem_need = (weight_buffer_count * param_bytes   # resident weights
                 + 2 * io_tile_bytes                 # double-buffered x / outs
                 + act_bytes)
    vmem_cap = _vmem_capacity_bytes()
    vmem_limit = int(min(0.85 * vmem_cap,
                         max(32 * 2**20, 1.25 * vmem_need)))

    xbar_p, z_p = pl.pallas_call(
        ae_kernel,
        out_shape=(
            jax.ShapeDtypeStruct((n_pad, pdims[6]), out_dtype),
            jax.ShapeDtypeStruct((n_pad, pdims[3]), out_dtype),
        ),
        grid=grid,
        in_specs=in_specs,
        out_specs=out_specs,
        compiler_params=pltpu.CompilerParams(
            dimension_semantics=("parallel",),
            vmem_limit_bytes=vmem_limit),
        cost_estimate=pl.CostEstimate(flops=int(flops), transcendentals=0,
                                      bytes_accessed=int(bytes_accessed)),
    )(xp, *flat)

    # Strip batch + lane padding.
    return xbar_p[:n, :n_input], z_p[:n, :n_z]


def init_params(key, n_enc_1, n_enc_2, n_dec_1, n_dec_2, n_input, n_z):
    """Deterministic init. Returns [(W[in,out], b[1,out])] * 6 in forward order."""
    dims = [
        (n_input, n_enc_1),   # enc_1
        (n_enc_1, n_enc_2),   # enc_2
        (n_enc_2, n_z),       # z_layer
        (n_z, n_dec_1),       # dec_1
        (n_dec_1, n_dec_2),   # dec_2
        (n_dec_2, n_input),   # x_bar_layer
    ]
    params = []
    for (fan_in, fan_out) in dims:
        key, kw, kb = jax.random.split(key, 3)
        bound = 1.0 / jnp.sqrt(fan_in)
        w = jax.random.uniform(kw, (fan_in, fan_out), jnp.float32, -bound, bound)
        b = jax.random.uniform(kb, (1, fan_out), jnp.float32, -bound, bound)
        params.append((w, b))
    return params


def ae_reference(x, params, compute_dtype=jnp.float32):
    """Pure-JAX reference mirroring the kernel's precision chain.

    With compute_dtype=f32 this is exactly the PyTorch AE forward.
    """
    cdt = compute_dtype

    def dense(h, wb, relu):
        w, b = wb
        y = jnp.dot(h.astype(cdt), w.astype(cdt),
                    preferred_element_type=jnp.float32) + b
        return jnp.maximum(y, 0.0) if relu else y

    h = dense(x, params[0], True).astype(cdt)
    h = dense(h, params[1], True).astype(cdt)
    z = dense(h, params[2], False)
    h = dense(z.astype(cdt), params[3], True).astype(cdt)
    h = dense(h, params[4], True).astype(cdt)
    x_bar = dense(h, params[5], False)
    return x_bar, z


if __name__ == "__main__":
    key = jax.random.PRNGKey(0)
    # small but module-consistent sizes
    n_input, n_enc_1, n_enc_2, n_z, n_dec_1, n_dec_2 = 32, 64, 64, 16, 64, 64
    batch = 16

    kx, kp = jax.random.split(key)
    x = jax.random.normal(kx, (batch, n_input), jnp.float32)
    params = init_params(kp, n_enc_1, n_enc_2, n_dec_1, n_dec_2, n_input, n_z)

    # f32 path (exact vs. reference). Prefer single-buffered resident weights;
    # fall back to default double-buffering if this build rejects Buffered(1).
    wbc = 1
    try:
        x_bar, z = jax.block_until_ready(
            ae_forward(x, params, compute_dtype=jnp.float32,
                       weight_buffer_count=wbc))
    except Exception:
        wbc = 2
        x_bar, z = jax.block_until_ready(
            ae_forward(x, params, compute_dtype=jnp.float32,
                       weight_buffer_count=wbc))

    x_bar_ref, z_ref = ae_reference(x, params)
    assert jnp.allclose(x_bar, x_bar_ref, atol=1e-4, rtol=1e-4)
    assert jnp.allclose(z, z_ref, atol=1e-4, rtol=1e-4)

    # bf16 weight + activation fast path (MXU-native on v5e/v6e/v7x),
    # compared against a same-precision reference.
    xb_bf, z_bf = jax.block_until_ready(
        ae_forward(x, params, compute_dtype=jnp.bfloat16,
                   weight_buffer_count=wbc))
    xb_bf_ref, z_bf_ref = ae_reference(x, params, compute_dtype=jnp.bfloat16)
    assert jnp.allclose(xb_bf, xb_bf_ref, atol=5e-2, rtol=5e-2)
    assert jnp.allclose(z_bf, z_bf_ref, atol=5e-2, rtol=5e-2)

    print("KERNEL_OK")
</pallas_src>

<mosaic_0001>
module attributes {stable_mosaic.version = 11 : i64} {
  func.func @ae_kernel(%arg0: i32, %arg1: memref<16x128xf32, #tpu.memory_space<vmem>>, %arg2: memref<128x128xf32, #tpu.memory_space<vmem>>, %arg3: memref<1x128xf32, #tpu.memory_space<vmem>>, %arg4: memref<128x128xf32, #tpu.memory_space<vmem>>, %arg5: memref<1x128xf32, #tpu.memory_space<vmem>>, %arg6: memref<128x128xf32, #tpu.memory_space<vmem>>, %arg7: memref<1x128xf32, #tpu.memory_space<vmem>>, %arg8: memref<128x128xf32, #tpu.memory_space<vmem>>, %arg9: memref<1x128xf32, #tpu.memory_space<vmem>>, %arg10: memref<128x128xf32, #tpu.memory_space<vmem>>, %arg11: memref<1x128xf32, #tpu.memory_space<vmem>>, %arg12: memref<128x128xf32, #tpu.memory_space<vmem>>, %arg13: memref<1x128xf32, #tpu.memory_space<vmem>>, %arg14: memref<16x128xf32, #tpu.memory_space<vmem>>, %arg15: memref<16x128xf32, #tpu.memory_space<vmem>>) attributes {dimension_semantics = [#tpu.dimension_semantics<parallel>], iteration_bounds = array<i64: 1>, scalar_prefetch = 0 : i64, scratch_operands = 0 : i64, tpu.core_type = #tpu.core_type<tc>, window_params = [{transform_indices = @transform_0, window_bounds = array<i64: 16, 128>}, {pipeline_mode = #tpu.pipeline_mode<synchronous>, transform_indices = @transform_1, window_bounds = array<i64: 128, 128>}, {pipeline_mode = #tpu.pipeline_mode<synchronous>, transform_indices = @transform_2, window_bounds = array<i64: 1, 128>}, {pipeline_mode = #tpu.pipeline_mode<synchronous>, transform_indices = @transform_3, window_bounds = array<i64: 128, 128>}, {pipeline_mode = #tpu.pipeline_mode<synchronous>, transform_indices = @transform_4, window_bounds = array<i64: 1, 128>}, {pipeline_mode = #tpu.pipeline_mode<synchronous>, transform_indices = @transform_5, window_bounds = array<i64: 128, 128>}, {pipeline_mode = #tpu.pipeline_mode<synchronous>, transform_indices = @transform_6, window_bounds = array<i64: 1, 128>}, {pipeline_mode = #tpu.pipeline_mode<synchronous>, transform_indices = @transform_7, window_bounds = array<i64: 128, 128>}, {pipeline_mode = #tpu.pipeline_mode<synchronous>, transform_indices = @transform_8, window_bounds = array<i64: 1, 128>}, {pipeline_mode = #tpu.pipeline_mode<synchronous>, transform_indices = @transform_9, window_bounds = array<i64: 128, 128>}, {pipeline_mode = #tpu.pipeline_mode<synchronous>, transform_indices = @transform_10, window_bounds = array<i64: 1, 128>}, {pipeline_mode = #tpu.pipeline_mode<synchronous>, transform_indices = @transform_11, window_bounds = array<i64: 128, 128>}, {pipeline_mode = #tpu.pipeline_mode<synchronous>, transform_indices = @transform_12, window_bounds = array<i64: 1, 128>}, {transform_indices = @transform_13, window_bounds = array<i64: 16, 128>}, {transform_indices = @transform_14, window_bounds = array<i64: 16, 128>}]} {
    %c0 = arith.constant 0 : index
    %c0_0 = arith.constant 0 : index
    %0 = vector.load %arg1[%c0, %c0_0] : memref<16x128xf32, #tpu.memory_space<vmem>>, vector<16x128xf32>
    %c0_1 = arith.constant 0 : index
    %c0_2 = arith.constant 0 : index
    %1 = vector.load %arg2[%c0_1, %c0_2] : memref<128x128xf32, #tpu.memory_space<vmem>>, vector<128x128xf32>
    %cst = arith.constant dense<0.000000e+00> : vector<16x128xf32>
    %2 = tpu.matmul %0, %1, %cst {dimension_numbers = #tpu.dot_dimension_numbers<[1], [0], [0], [1], [0, 0, 1, 1], [], []>} : vector<16x128xf32>, vector<128x128xf32>, vector<16x128xf32> -> vector<16x128xf32>
    %c0_3 = arith.constant 0 : index
    %c0_4 = arith.constant 0 : index
    %3 = vector.load %arg3[%c0_3, %c0_4] : memref<1x128xf32, #tpu.memory_space<vmem>>, vector<1x128xf32>
    %4 = vector.broadcast %3 : vector<1x128xf32> to vector<16x128xf32>
    %5 = arith.addf %2, %4 : vector<16x128xf32>
    %cst_5 = arith.constant 0.000000e+00 : f32
    %6 = vector.broadcast %cst_5 : f32 to vector<16x128xf32>
    %7 = arith.maximumf %5, %6 : vector<16x128xf32>
    %c0_6 = arith.constant 0 : index
    %c0_7 = arith.constant 0 : index
    %8 = vector.load %arg4[%c0_6, %c0_7] : memref<128x128xf32, #tpu.memory_space<vmem>>, vector<128x128xf32>
    %cst_8 = arith.constant dense<0.000000e+00> : vector<16x128xf32>
    %9 = tpu.matmul %7, %8, %cst_8 {dimension_numbers = #tpu.dot_dimension_numbers<[1], [0], [0], [1], [0, 0, 1, 1], [], []>} : vector<16x128xf32>, vector<128x128xf32>, vector<16x128xf32> -> vector<16x128xf32>
    %c0_9 = arith.constant 0 : index
    %c0_10 = arith.constant 0 : index
    %10 = vector.load %arg5[%c0_9, %c0_10] : memref<1x128xf32, #tpu.memory_space<vmem>>, vector<1x128xf32>
    %11 = vector.broadcast %10 : vector<1x128xf32> to vector<16x128xf32>
    %12 = arith.addf %9, %11 : vector<16x128xf32>
    %cst_11 = arith.constant 0.000000e+00 : f32
    %13 = vector.broadcast %cst_11 : f32 to vector<16x128xf32>
    %14 = arith.maximumf %12, %13 : vector<16x128xf32>
    %c0_12 = arith.constant 0 : index
    %c0_13 = arith.constant 0 : index
    %15 = vector.load %arg6[%c0_12, %c0_13] : memref<128x128xf32, #tpu.memory_space<vmem>>, vector<128x128xf32>
    %cst_14 = arith.constant dense<0.000000e+00> : vector<16x128xf32>
    %16 = tpu.matmul %14, %15, %cst_14 {dimension_numbers = #tpu.dot_dimension_numbers<[1], [0], [0], [1], [0, 0, 1, 1], [], []>} : vector<16x128xf32>, vector<128x128xf32>, vector<16x128xf32> -> vector<16x128xf32>
    %c0_15 = arith.constant 0 : index
    %c0_16 = arith.constant 0 : index
    %17 = vector.load %arg7[%c0_15, %c0_16] : memref<1x128xf32, #tpu.memory_space<vmem>>, vector<1x128xf32>
    %18 = vector.broadcast %17 : vector<1x128xf32> to vector<16x128xf32>
    %19 = arith.addf %16, %18 : vector<16x128xf32>
    %c0_17 = arith.constant 0 : index
    %c0_18 = arith.constant 0 : index
    %20 = vector.load %arg8[%c0_17, %c0_18] : memref<128x128xf32, #tpu.memory_space<vmem>>, vector<128x128xf32>
    %cst_19 = arith.constant dense<0.000000e+00> : vector<16x128xf32>
    %21 = tpu.matmul %19, %20, %cst_19 {dimension_numbers = #tpu.dot_dimension_numbers<[1], [0], [0], [1], [0, 0, 1, 1], [], []>} : vector<16x128xf32>, vector<128x128xf32>, vector<16x128xf32> -> vector<16x128xf32>
    %c0_20 = arith.constant 0 : index
    %c0_21 = arith.constant 0 : index
    %22 = vector.load %arg9[%c0_20, %c0_21] : memref<1x128xf32, #tpu.memory_space<vmem>>, vector<1x128xf32>
    %23 = vector.broadcast %22 : vector<1x128xf32> to vector<16x128xf32>
    %24 = arith.addf %21, %23 : vector<16x128xf32>
    %cst_22 = arith.constant 0.000000e+00 : f32
    %25 = vector.broadcast %cst_22 : f32 to vector<16x128xf32>
    %26 = arith.maximumf %24, %25 : vector<16x128xf32>
    %c0_23 = arith.constant 0 : index
    %c0_24 = arith.constant 0 : index
    %27 = vector.load %arg10[%c0_23, %c0_24] : memref<128x128xf32, #tpu.memory_space<vmem>>, vector<128x128xf32>
    %cst_25 = arith.constant dense<0.000000e+00> : vector<16x128xf32>
    %28 = tpu.matmul %26, %27, %cst_25 {dimension_numbers = #tpu.dot_dimension_numbers<[1], [0], [0], [1], [0, 0, 1, 1], [], []>} : vector<16x128xf32>, vector<128x128xf32>, vector<16x128xf32> -> vector<16x128xf32>
    %c0_26 = arith.constant 0 : index
    %c0_27 = arith.constant 0 : index
    %29 = vector.load %arg11[%c0_26, %c0_27] : memref<1x128xf32, #tpu.memory_space<vmem>>, vector<1x128xf32>
    %30 = vector.broadcast %29 : vector<1x128xf32> to vector<16x128xf32>
    %31 = arith.addf %28, %30 : vector<16x128xf32>
    %cst_28 = arith.constant 0.000000e+00 : f32
    %32 = vector.broadcast %cst_28 : f32 to vector<16x128xf32>
    %33 = arith.maximumf %31, %32 : vector<16x128xf32>
    %c0_29 = arith.constant 0 : index
    %c0_30 = arith.constant 0 : index
    %34 = vector.load %arg12[%c0_29, %c0_30] : memref<128x128xf32, #tpu.memory_space<vmem>>, vector<128x128xf32>
    %cst_31 = arith.constant dense<0.000000e+00> : vector<16x128xf32>
    %35 = tpu.matmul %33, %34, %cst_31 {dimension_numbers = #tpu.dot_dimension_numbers<[1], [0], [0], [1], [0, 0, 1, 1], [], []>} : vector<16x128xf32>, vector<128x128xf32>, vector<16x128xf32> -> vector<16x128xf32>
    %c0_32 = arith.constant 0 : index
    %c0_33 = arith.constant 0 : index
    %36 = vector.load %arg13[%c0_32, %c0_33] : memref<1x128xf32, #tpu.memory_space<vmem>>, vector<1x128xf32>
    %37 = vector.broadcast %36 : vector<1x128xf32> to vector<16x128xf32>
    %38 = arith.addf %35, %37 : vector<16x128xf32>
    %c0_34 = arith.constant 0 : index
    %c0_35 = arith.constant 0 : index
    %39 = vector.load %arg14[%c0_34, %c0_35] : memref<16x128xf32, #tpu.memory_space<vmem>>, vector<16x128xf32>
    tpu.vector_store %arg14[%c0_34, %c0_35], %38 {strides = array<i32>} : memref<16x128xf32, #tpu.memory_space<vmem>>, vector<16x128xf32>,
    %c0_36 = arith.constant 0 : index
    %c0_37 = arith.constant 0 : index
    %40 = vector.load %arg15[%c0_36, %c0_37] : memref<16x128xf32, #tpu.memory_space<vmem>>, vector<16x128xf32>
    tpu.vector_store %arg15[%c0_36, %c0_37], %19 {strides = array<i32>} : memref<16x128xf32, #tpu.memory_space<vmem>>, vector<16x128xf32>,
    return
  }
  func.func @transform_0(%arg0: i32) -> (i32, i32) {
    %c0_i32 = arith.constant 0 : i32
    %c0_i32_0 = arith.constant 0 : i32
    return %arg0, %c0_i32 : i32, i32
  }
  func.func @transform_1(%arg0: i32) -> (i32, i32) {
    %c0_i32 = arith.constant 0 : i32
    %c0_i32_0 = arith.constant 0 : i32
    %c0_i32_1 = arith.constant 0 : i32
    return %c0_i32, %c0_i32_0 : i32, i32
  }
  func.func @transform_2(%arg0: i32) -> (i32, i32) {
    %c0_i32 = arith.constant 0 : i32
    %c0_i32_0 = arith.constant 0 : i32
    %c0_i32_1 = arith.constant 0 : i32
    return %c0_i32, %c0_i32_0 : i32, i32
  }
  func.func @transform_3(%arg0: i32) -> (i32, i32) {
    %c0_i32 = arith.constant 0 : i32
    %c0_i32_0 = arith.constant 0 : i32
    %c0_i32_1 = arith.constant 0 : i32
    return %c0_i32, %c0_i32_0 : i32, i32
  }
  func.func @transform_4(%arg0: i32) -> (i32, i32) {
    %c0_i32 = arith.constant 0 : i32
    %c0_i32_0 = arith.constant 0 : i32
    %c0_i32_1 = arith.constant 0 : i32
    return %c0_i32, %c0_i32_0 : i32, i32
  }
  func.func @transform_5(%arg0: i32) -> (i32, i32) {
    %c0_i32 = arith.constant 0 : i32
    %c0_i32_0 = arith.constant 0 : i32
    %c0_i32_1 = arith.constant 0 : i32
    return %c0_i32, %c0_i32_0 : i32, i32
  }
  func.func @transform_6(%arg0: i32) -> (i32, i32) {
    %c0_i32 = arith.constant 0 : i32
    %c0_i32_0 = arith.constant 0 : i32
    %c0_i32_1 = arith.constant 0 : i32
    return %c0_i32, %c0_i32_0 : i32, i32
  }
  func.func @transform_7(%arg0: i32) -> (i32, i32) {
    %c0_i32 = arith.constant 0 : i32
    %c0_i32_0 = arith.constant 0 : i32
    %c0_i32_1 = arith.constant 0 : i32
    return %c0_i32, %c0_i32_0 : i32, i32
  }
  func.func @transform_8(%arg0: i32) -> (i32, i32) {
    %c0_i32 = arith.constant 0 : i32
    %c0_i32_0 = arith.constant 0 : i32
    %c0_i32_1 = arith.constant 0 : i32
    return %c0_i32, %c0_i32_0 : i32, i32
  }
  func.func @transform_9(%arg0: i32) -> (i32, i32) {
    %c0_i32 = arith.constant 0 : i32
    %c0_i32_0 = arith.constant 0 : i32
    %c0_i32_1 = arith.constant 0 : i32
    return %c0_i32, %c0_i32_0 : i32, i32
  }
  func.func @transform_10(%arg0: i32) -> (i32, i32) {
    %c0_i32 = arith.constant 0 : i32
    %c0_i32_0 = arith.constant 0 : i32
    %c0_i32_1 = arith.constant 0 : i32
    return %c0_i32, %c0_i32_0 : i32, i32
  }
  func.func @transform_11(%arg0: i32) -> (i32, i32) {
    %c0_i32 = arith.constant 0 : i32
    %c0_i32_0 = arith.constant 0 : i32
    %c0_i32_1 = arith.constant 0 : i32
    return %c0_i32, %c0_i32_0 : i32, i32
  }
  func.func @transform_12(%arg0: i32) -> (i32, i32) {
    %c0_i32 = arith.constant 0 : i32
    %c0_i32_0 = arith.constant 0 : i32
    %c0_i32_1 = arith.constant 0 : i32
    return %c0_i32, %c0_i32_0 : i32, i32
  }
  func.func @transform_13(%arg0: i32) -> (i32, i32) {
    %c0_i32 = arith.constant 0 : i32
    %c0_i32_0 = arith.constant 0 : i32
    return %arg0, %c0_i32 : i32, i32
  }
  func.func @transform_14(%arg0: i32) -> (i32, i32) {
    %c0_i32 = arith.constant 0 : i32
    %c0_i32_0 = arith.constant 0 : i32
    return %arg0, %c0_i32 : i32, i32
  }
}

module attributes {stable_mosaic.version = 11 : i64} {
  func.func @ae_kernel(%arg0: i32, %arg1: memref<16x128xf32, #tpu.memory_space<vmem>>, %arg2: memref<128x128xf32, #tpu.memory_space<vmem>>, %arg3: memref<1x128xf32, #tpu.memory_space<vmem>>, %arg4: memref<128x128xf32, #tpu.memory_space<vmem>>, %arg5: memref<1x128xf32, #tpu.memory_space<vmem>>, %arg6: memref<128x128xf32, #tpu.memory_space<vmem>>, %arg7: memref<1x128xf32, #tpu.memory_space<vmem>>, %arg8: memref<128x128xf32, #tpu.memory_space<vmem>>, %arg9: memref<1x128xf32, #tpu.memory_space<vmem>>, %arg10: memref<128x128xf32, #tpu.memory_space<vmem>>, %arg11: memref<1x128xf32, #tpu.memory_space<vmem>>, %arg12: memref<128x128xf32, #tpu.memory_space<vmem>>, %arg13: memref<1x128xf32, #tpu.memory_space<vmem>>, %arg14: memref<16x128xf32, #tpu.memory_space<vmem>>, %arg15: memref<16x128xf32, #tpu.memory_space<vmem>>) attributes {dimension_semantics = [#tpu.dimension_semantics<parallel>], iteration_bounds = array<i64: 1>, scalar_prefetch = 0 : i64, scratch_operands = 0 : i64, tpu.core_type = #tpu.core_type<tc>, window_params = [{transform_indices = @transform_0, window_bounds = array<i64: 16, 128>}, {pipeline_mode = #tpu.pipeline_mode<synchronous>, transform_indices = @transform_1, window_bounds = array<i64: 128, 128>}, {pipeline_mode = #tpu.pipeline_mode<synchronous>, transform_indices = @transform_2, window_bounds = array<i64: 1, 128>}, {pipeline_mode = #tpu.pipeline_mode<synchronous>, transform_indices = @transform_3, window_bounds = array<i64: 128, 128>}, {pipeline_mode = #tpu.pipeline_mode<synchronous>, transform_indices = @transform_4, window_bounds = array<i64: 1, 128>}, {pipeline_mode = #tpu.pipeline_mode<synchronous>, transform_indices = @transform_5, window_bounds = array<i64: 128, 128>}, {pipeline_mode = #tpu.pipeline_mode<synchronous>, transform_indices = @transform_6, window_bounds = array<i64: 1, 128>}, {pipeline_mode = #tpu.pipeline_mode<synchronous>, transform_indices = @transform_7, window_bounds = array<i64: 128, 128>}, {pipeline_mode = #tpu.pipeline_mode<synchronous>, transform_indices = @transform_8, window_bounds = array<i64: 1, 128>}, {pipeline_mode = #tpu.pipeline_mode<synchronous>, transform_indices = @transform_9, window_bounds = array<i64: 128, 128>}, {pipeline_mode = #tpu.pipeline_mode<synchronous>, transform_indices = @transform_10, window_bounds = array<i64: 1, 128>}, {pipeline_mode = #tpu.pipeline_mode<synchronous>, transform_indices = @transform_11, window_bounds = array<i64: 128, 128>}, {pipeline_mode = #tpu.pipeline_mode<synchronous>, transform_indices = @transform_12, window_bounds = array<i64: 1, 128>}, {transform_indices = @transform_13, window_bounds = array<i64: 16, 128>}, {transform_indices = @transform_14, window_bounds = array<i64: 16, 128>}]} {
    %c0 = arith.constant 0 : index
    %c0_0 = arith.constant 0 : index
    %0 = vector.load %arg1[%c0, %c0_0] : memref<16x128xf32, #tpu.memory_space<vmem>>, vector<16x128xf32>
    %c0_1 = arith.constant 0 : index
    %c0_2 = arith.constant 0 : index
    %1 = vector.load %arg2[%c0_1, %c0_2] : memref<128x128xf32, #tpu.memory_space<vmem>>, vector<128x128xf32>
    %cst = arith.constant dense<0.000000e+00> : vector<16x128xf32>
    %2 = tpu.matmul %0, %1, %cst {dimension_numbers = #tpu.dot_dimension_numbers<[1], [0], [0], [1], [0, 0, 1, 1], [], []>} : vector<16x128xf32>, vector<128x128xf32>, vector<16x128xf32> -> vector<16x128xf32>
    %c0_3 = arith.constant 0 : index
    %c0_4 = arith.constant 0 : index
    %3 = vector.load %arg3[%c0_3, %c0_4] : memref<1x128xf32, #tpu.memory_space<vmem>>, vector<1x128xf32>
    %4 = vector.broadcast %3 : vector<1x128xf32> to vector<16x128xf32>
    %5 = arith.addf %2, %4 : vector<16x128xf32>
    %cst_5 = arith.constant 0.000000e+00 : f32
    %6 = vector.broadcast %cst_5 : f32 to vector<16x128xf32>
    %7 = arith.maximumf %5, %6 : vector<16x128xf32>
    %c0_6 = arith.constant 0 : index
    %c0_7 = arith.constant 0 : index
    %8 = vector.load %arg4[%c0_6, %c0_7] : memref<128x128xf32, #tpu.memory_space<vmem>>, vector<128x128xf32>
    %cst_8 = arith.constant dense<0.000000e+00> : vector<16x128xf32>
    %9 = tpu.matmul %7, %8, %cst_8 {dimension_numbers = #tpu.dot_dimension_numbers<[1], [0], [0], [1], [0, 0, 1, 1], [], []>} : vector<16x128xf32>, vector<128x128xf32>, vector<16x128xf32> -> vector<16x128xf32>
    %c0_9 = arith.constant 0 : index
    %c0_10 = arith.constant 0 : index
    %10 = vector.load %arg5[%c0_9, %c0_10] : memref<1x128xf32, #tpu.memory_space<vmem>>, vector<1x128xf32>
    %11 = vector.broadcast %10 : vector<1x128xf32> to vector<16x128xf32>
    %12 = arith.addf %9, %11 : vector<16x128xf32>
    %cst_11 = arith.constant 0.000000e+00 : f32
    %13 = vector.broadcast %cst_11 : f32 to vector<16x128xf32>
    %14 = arith.maximumf %12, %13 : vector<16x128xf32>
    %c0_12 = arith.constant 0 : index
    %c0_13 = arith.constant 0 : index
    %15 = vector.load %arg6[%c0_12, %c0_13] : memref<128x128xf32, #tpu.memory_space<vmem>>, vector<128x128xf32>
    %cst_14 = arith.constant dense<0.000000e+00> : vector<16x128xf32>
    %16 = tpu.matmul %14, %15, %cst_14 {dimension_numbers = #tpu.dot_dimension_numbers<[1], [0], [0], [1], [0, 0, 1, 1], [], []>} : vector<16x128xf32>, vector<128x128xf32>, vector<16x128xf32> -> vector<16x128xf32>
    %c0_15 = arith.constant 0 : index
    %c0_16 = arith.constant 0 : index
    %17 = vector.load %arg7[%c0_15, %c0_16] : memref<1x128xf32, #tpu.memory_space<vmem>>, vector<1x128xf32>
    %18 = vector.broadcast %17 : vector<1x128xf32> to vector<16x128xf32>
    %19 = arith.addf %16, %18 : vector<16x128xf32>
    %c0_17 = arith.constant 0 : index
    %c0_18 = arith.constant 0 : index
    %20 = vector.load %arg8[%c0_17, %c0_18] : memref<128x128xf32, #tpu.memory_space<vmem>>, vector<128x128xf32>
    %cst_19 = arith.constant dense<0.000000e+00> : vector<16x128xf32>
    %21 = tpu.matmul %19, %20, %cst_19 {dimension_numbers = #tpu.dot_dimension_numbers<[1], [0], [0], [1], [0, 0, 1, 1], [], []>} : vector<16x128xf32>, vector<128x128xf32>, vector<16x128xf32> -> vector<16x128xf32>
    %c0_20 = arith.constant 0 : index
    %c0_21 = arith.constant 0 : index
    %22 = vector.load %arg9[%c0_20, %c0_21] : memref<1x128xf32, #tpu.memory_space<vmem>>, vector<1x128xf32>
    %23 = vector.broadcast %22 : vector<1x128xf32> to vector<16x128xf32>
    %24 = arith.addf %21, %23 : vector<16x128xf32>
    %cst_22 = arith.constant 0.000000e+00 : f32
    %25 = vector.broadcast %cst_22 : f32 to vector<16x128xf32>
    %26 = arith.maximumf %24, %25 : vector<16x128xf32>
    %c0_23 = arith.constant 0 : index
    %c0_24 = arith.constant 0 : index
    %27 = vector.load %arg10[%c0_23, %c0_24] : memref<128x128xf32, #tpu.memory_space<vmem>>, vector<128x128xf32>
    %cst_25 = arith.constant dense<0.000000e+00> : vector<16x128xf32>
    %28 = tpu.matmul %26, %27, %cst_25 {dimension_numbers = #tpu.dot_dimension_numbers<[1], [0], [0], [1], [0, 0, 1, 1], [], []>} : vector<16x128xf32>, vector<128x128xf32>, vector<16x128xf32> -> vector<16x128xf32>
    %c0_26 = arith.constant 0 : index
    %c0_27 = arith.constant 0 : index
    %29 = vector.load %arg11[%c0_26, %c0_27] : memref<1x128xf32, #tpu.memory_space<vmem>>, vector<1x128xf32>
    %30 = vector.broadcast %29 : vector<1x128xf32> to vector<16x128xf32>
    %31 = arith.addf %28, %30 : vector<16x128xf32>
    %cst_28 = arith.constant 0.000000e+00 : f32
    %32 = vector.broadcast %cst_28 : f32 to vector<16x128xf32>
    %33 = arith.maximumf %31, %32 : vector<16x128xf32>
    %c0_29 = arith.constant 0 : index
    %c0_30 = arith.constant 0 : index
    %34 = vector.load %arg12[%c0_29, %c0_30] : memref<128x128xf32, #tpu.memory_space<vmem>>, vector<128x128xf32>
    %cst_31 = arith.constant dense<0.000000e+00> : vector<16x128xf32>
    %35 = tpu.matmul %33, %34, %cst_31 {dimension_numbers = #tpu.dot_dimension_numbers<[1], [0], [0], [1], [0, 0, 1, 1], [], []>} : vector<16x128xf32>, vector<128x128xf32>, vector<16x128xf32> -> vector<16x128xf32>
    %c0_32 = arith.constant 0 : index
    %c0_33 = arith.constant 0 : index
    %36 = vector.load %arg13[%c0_32, %c0_33] : memref<1x128xf32, #tpu.memory_space<vmem>>, vector<1x128xf32>
    %37 = vector.broadcast %36 : vector<1x128xf32> to vector<16x128xf32>
    %38 = arith.addf %35, %37 : vector<16x128xf32>
    %c0_34 = arith.constant 0 : index
    %c0_35 = arith.constant 0 : index
    %39 = vector.load %arg14[%c0_34, %c0_35] : memref<16x128xf32, #tpu.memory_space<vmem>>, vector<16x128xf32>
    tpu.vector_store %arg14[%c0_34, %c0_35], %38 {strides = array<i32>} : memref<16x128xf32, #tpu.memory_space<vmem>>, vector<16x128xf32>,
    %c0_36 = arith.constant 0 : index
    %c0_37 = arith.constant 0 : index
    %40 = vector.load %arg15[%c0_36, %c0_37] : memref<16x128xf32, #tpu.memory_space<vmem>>, vector<16x128xf32>
    tpu.vector_store %arg15[%c0_36, %c0_37], %19 {strides = array<i32>} : memref<16x128xf32, #tpu.memory_space<vmem>>, vector<16x128xf32>,
    return
  }
  func.func @transform_0(%arg0: i32) -> (i32, i32) {
    %c0_i32 = arith.constant 0 : i32
    %c0_i32_0 = arith.constant 0 : i32
    return %arg0, %c0_i32 : i32, i32
  }
  func.func @transform_1(%arg0: i32) -> (i32, i32) {
    %c0_i32 = arith.constant 0 : i32
    %c0_i32_0 = arith.constant 0 : i32
    %c0_i32_1 = arith.constant 0 : i32
    return %c0_i32, %c0_i32_0 : i32, i32
  }
  func.func @transform_2(%arg0: i32) -> (i32, i32) {
    %c0_i32 = arith.constant 0 : i32
    %c0_i32_0 = arith.constant 0 : i32
    %c0_i32_1 = arith.constant 0 : i32
    return %c0_i32, %c0_i32_0 : i32, i32
  }
  func.func @transform_3(%arg0: i32) -> (i32, i32) {
    %c0_i32 = arith.constant 0 : i32
    %c0_i32_0 = arith.constant 0 : i32
    %c0_i32_1 = arith.constant 0 : i32
    return %c0_i32, %c0_i32_0 : i32, i32
  }
  func.func @transform_4(%arg0: i32) -> (i32, i32) {
    %c0_i32 = arith.constant 0 : i32
    %c0_i32_0 = arith.constant 0 : i32
    %c0_i32_1 = arith.constant 0 : i32
    return %c0_i32, %c0_i32_0 : i32, i32
  }
  func.func @transform_5(%arg0: i32) -> (i32, i32) {
    %c0_i32 = arith.constant 0 : i32
    %c0_i32_0 = arith.constant 0 : i32
    %c0_i32_1 = arith.constant 0 : i32
    return %c0_i32, %c0_i32_0 : i32, i32
  }
  func.func @transform_6(%arg0: i32) -> (i32, i32) {
    %c0_i32 = arith.constant 0 : i32
    %c0_i32_0 = arith.constant 0 : i32
    %c0_i32_1 = arith.constant 0 : i32
    return %c0_i32, %c0_i32_0 : i32, i32
  }
  func.func @transform_7(%arg0: i32) -> (i32, i32) {
    %c0_i32 = arith.constant 0 : i32
    %c0_i32_0 = arith.constant 0 : i32
    %c0_i32_1 = arith.constant 0 : i32
    return %c0_i32, %c0_i32_0 : i32, i32
  }
  func.func @transform_8(%arg0: i32) -> (i32, i32) {
    %c0_i32 = arith.constant 0 : i32
    %c0_i32_0 = arith.constant 0 : i32
    %c0_i32_1 = arith.constant 0 : i32
    return %c0_i32, %c0_i32_0 : i32, i32
  }
  func.func @transform_9(%arg0: i32) -> (i32, i32) {
    %c0_i32 = arith.constant 0 : i32
    %c0_i32_0 = arith.constant 0 : i32
    %c0_i32_1 = arith.constant 0 : i32
    return %c0_i32, %c0_i32_0 : i32, i32
  }
  func.func @transform_10(%arg0: i32) -> (i32, i32) {
    %c0_i32 = arith.constant 0 : i32
    %c0_i32_0 = arith.constant 0 : i32
    %c0_i32_1 = arith.constant 0 : i32
    return %c0_i32, %c0_i32_0 : i32, i32
  }
  func.func @transform_11(%arg0: i32) -> (i32, i32) {
    %c0_i32 = arith.constant 0 : i32
    %c0_i32_0 = arith.constant 0 : i32
    %c0_i32_1 = arith.constant 0 : i32
    return %c0_i32, %c0_i32_0 : i32, i32
  }
  func.func @transform_12(%arg0: i32) -> (i32, i32) {
    %c0_i32 = arith.constant 0 : i32
    %c0_i32_0 = arith.constant 0 : i32
    %c0_i32_1 = arith.constant 0 : i32
    return %c0_i32, %c0_i32_0 : i32, i32
  }
  func.func @transform_13(%arg0: i32) -> (i32, i32) {
    %c0_i32 = arith.constant 0 : i32
    %c0_i32_0 = arith.constant 0 : i32
    return %arg0, %c0_i32 : i32, i32
  }
  func.func @transform_14(%arg0: i32) -> (i32, i32) {
    %c0_i32 = arith.constant 0 : i32
    %c0_i32_0 = arith.constant 0 : i32
    return %arg0, %c0_i32 : i32, i32
  }
}

</mosaic_0001>

<llo_original>
// kernel: ae_forward.1
$region0: #{ae_forward.1}
  #allocation0 [shape = 'u32[]', space=smem, size = 0x4, offset = 0x4, fixed_abs, tag = 'smem constant byte address 0x4 - core index']
  #allocation1 [shape = 'u32[72,128]{1,0:T(1,128)}', space=vmem, size = 0x9000, scoped, tag = 'internal scratch']
  %s0 = inlined_call_operand.vmem [shape: f32[16,128], index: 0, kind: input, shape index: {}]
  %s1 = inlined_call_operand.vmem [shape: f32[128,128], index: 1, kind: input, shape index: {}]
  %s2 = inlined_call_operand.vmem [shape: f32[1,128], index: 2, kind: input, shape index: {}]
  %s3 = inlined_call_operand.vmem [shape: f32[128,128], index: 3, kind: input, shape index: {}]
  %s4 = inlined_call_operand.vmem [shape: f32[1,128], index: 4, kind: input, shape index: {}]
  %s5 = inlined_call_operand.vmem [shape: f32[128,128], index: 5, kind: input, shape index: {}]
  %s6 = inlined_call_operand.vmem [shape: f32[1,128], index: 6, kind: input, shape index: {}]
  %s7 = inlined_call_operand.vmem [shape: f32[128,128], index: 7, kind: input, shape index: {}]
  %s8 = inlined_call_operand.vmem [shape: f32[1,128], index: 8, kind: input, shape index: {}]
  %s9 = inlined_call_operand.vmem [shape: f32[128,128], index: 9, kind: input, shape index: {}]
  %s10 = inlined_call_operand.vmem [shape: f32[1,128], index: 10, kind: input, shape index: {}]
  %s11 = inlined_call_operand.vmem [shape: f32[128,128], index: 11, kind: input, shape index: {}]
  %s12 = inlined_call_operand.vmem [shape: f32[1,128], index: 12, kind: input, shape index: {}]
  %s13 = inlined_call_operand.hbm [shape: f32[16,128], index: 13, kind: output, shape index: {0}]
  %s14 = inlined_call_operand.hbm [shape: f32[16,128], index: 14, kind: output, shape index: {1}]
  %15 = xla_tuple %s13, %s14
  %s16 = sld [smem:[#allocation0]]
  $region70: #{ae_forward.1} parent=0
    _
  %s18 = ssub.s32 1, %s16
  %s19 = scalar_select 0, %s18, %s16
  $region1: #{ae_forward.1} parent=0
    #allocation2 [shape = 'u8[8192]{0}', space=vmem, size = 0x2000, scoped, tag = 'output window, operand 0, single buffered']
    #allocation3 [shape = 's32[1]{0}', space=sflag, size = 0x4, scoped, tag = 'scoped memory for ae_forward.1']
    #allocation4 [shape = 'u8[8192]{0}', space=vmem, size = 0x2000, scoped, tag = 'output window, operand 1, single buffered']
    #allocation5 [shape = 's32[1]{0}', space=sflag, size = 0x4, scoped, tag = 'scoped memory for ae_forward.1']
    %20 = vsyncpa [#allocation3], 0
    %21 = vsyncpa [#allocation5], 0
    // Predicated region
    $region2: #{ae_forward.1} parent=1 // pred_check
      _
    $region3: #{ae_forward.1} parent=1 // pred_check_branch
      %23 = sbr.rel (0) target = $region5
    $region4: #{ae_forward.1} parent=1 // pred_region
      _
    $region5: #{ae_forward.1} parent=1 // pred_fallthru
      _
    // Predicated region
    $region6: #{ae_forward.1} parent=1 // pred_check
      _
    $region7: #{ae_forward.1} parent=1 // pred_check_branch
      %25 = sbr.rel (0) target = $region9
    $region8: #{ae_forward.1} parent=1 // pred_region
      _
    $region9: #{ae_forward.1} parent=1 // pred_fallthru
      _
    // Predicated region
    $region10: #{ae_forward.1} parent=1 // pred_check
      _
    $region11: #{ae_forward.1} parent=1 // pred_check_branch
      %27 = sbr.rel (0) target = $region13
    $region12: #{ae_forward.1} parent=1 // pred_region
      _
    $region13: #{ae_forward.1} parent=1 // pred_fallthru
      _
    // Predicated region
    $region14: #{ae_forward.1} parent=1 // pred_check
      _
    $region15: #{ae_forward.1} parent=1 // pred_check_branch
      %29 = sbr.rel (0) target = $region17
    $region16: #{ae_forward.1} parent=1 // pred_region
      _
    $region17: #{ae_forward.1} parent=1 // pred_fallthru
      _
    // Predicated region
    $region18: #{ae_forward.1} parent=1 // pred_check
      _
    $region19: #{ae_forward.1} parent=1 // pred_check_branch
      %31 = sbr.rel (0) target = $region21
    $region20: #{ae_forward.1} parent=1 // pred_region
      _
    $region21: #{ae_forward.1} parent=1 // pred_fallthru
      _
    // Predicated region
    $region22: #{ae_forward.1} parent=1 // pred_check
      _
    $region23: #{ae_forward.1} parent=1 // pred_check_branch
      %33 = sbr.rel (0) target = $region25
    $region24: #{ae_forward.1} parent=1 // pred_region
      _
    $region25: #{ae_forward.1} parent=1 // pred_fallthru
      _
    // Predicated region
    $region26: #{ae_forward.1} parent=1 // pred_check
      _
    $region27: #{ae_forward.1} parent=1 // pred_check_branch
      %35 = sbr.rel (0) target = $region29
    $region28: #{ae_forward.1} parent=1 // pred_region
      _
    $region29: #{ae_forward.1} parent=1 // pred_fallthru
      _
    // Predicated region
    $region30: #{ae_forward.1} parent=1 // pred_check
      _
    $region31: #{ae_forward.1} parent=1 // pred_check_branch
      %37 = sbr.rel (0) target = $region33
    $region32: #{ae_forward.1} parent=1 // pred_region
      _
    $region33: #{ae_forward.1} parent=1 // pred_fallthru
      _
    // Predicated region
    $region34: #{ae_forward.1} parent=1 // pred_check
      _
    $region35: #{ae_forward.1} parent=1 // pred_check_branch
      %39 = sbr.rel (0) target = $region37
    $region36: #{ae_forward.1} parent=1 // pred_region
      _
    $region37: #{ae_forward.1} parent=1 // pred_fallthru
      _
    // Predicated region
    $region38: #{ae_forward.1} parent=1 // pred_check
      _
    $region39: #{ae_forward.1} parent=1 // pred_check_branch
      %41 = sbr.rel (0) target = $region41
    $region40: #{ae_forward.1} parent=1 // pred_region
      _
    $region41: #{ae_forward.1} parent=1 // pred_fallthru
      _
    // Predicated region
    $region42: #{ae_forward.1} parent=1 // pred_check
      _
    $region43: #{ae_forward.1} parent=1 // pred_check_branch
      %43 = sbr.rel (0) target = $region45
    $region44: #{ae_forward.1} parent=1 // pred_region
      _
    $region45: #{ae_forward.1} parent=1 // pred_fallthru
      _
    // Predicated region
    $region46: #{ae_forward.1} parent=1 // pred_check
      _
    $region47: #{ae_forward.1} parent=1 // pred_check_branch
      %45 = sbr.rel (0) target = $region49
    $region48: #{ae_forward.1} parent=1 // pred_region
      _
    $region49: #{ae_forward.1} parent=1 // pred_fallthru
      _
    // Predicated region
    $region50: #{ae_forward.1} parent=1 // pred_check
      _
    $region51: #{ae_forward.1} parent=1 // pred_check_branch
      %47 = sbr.rel (0) target = $region53
    $region52: #{ae_forward.1} parent=1 // pred_region
      _
    $region53: #{ae_forward.1} parent=1 // pred_fallthru
      _
    %v48 = vld [vmem:[%s0] sm:$0xff]
    %v49 = vld [vmem:[%s0 + $0x8] sm:$0xff]
    %v50 = vld [vmem:[%s1] sm:$0xff]
    %v51 = vld [vmem:[%s1 + $0x8] sm:$0xff]
    %v52 = vld [vmem:[%s1 + $0x10] sm:$0xff]
    %v53 = vld [vmem:[%s1 + $0x18] sm:$0xff]
    %v54 = vld [vmem:[%s1 + $0x20] sm:$0xff]
    %v55 = vld [vmem:[%s1 + $0x28] sm:$0xff]
    %v56 = vld [vmem:[%s1 + $0x30] sm:$0xff]
    %v57 = vld [vmem:[%s1 + $0x38] sm:$0xff]
    %v58 = vld [vmem:[%s1 + $0x40] sm:$0xff]
    %v59 = vld [vmem:[%s1 + $0x48] sm:$0xff]
    %v60 = vld [vmem:[%s1 + $0x50] sm:$0xff]
    %v61 = vld [vmem:[%s1 + $0x58] sm:$0xff]
    %v62 = vld [vmem:[%s1 + $0x60] sm:$0xff]
    %v63 = vld [vmem:[%s1 + $0x68] sm:$0xff]
    %v64 = vld [vmem:[%s1 + $0x70] sm:$0xff]
    %v65 = vld [vmem:[%s1 + $0x78] sm:$0xff]
    %v66 = vld [vmem:[%s2] sm:$0x1]
    %v68 = vperm.slane %v66, 0
    %70 = vmatpush.msra.mxu0 %v65
    %71 = vmatpush.msra.mxu0 %v64
    %72 = vmatpush.msra.mxu0 %v63
    %73 = vmatpush.msra.mxu0 %v62
    %74 = vmatpush.msra.mxu0 %v61
    %75 = vmatpush.msra.mxu0 %v60
    %76 = vmatpush.msra.mxu0 %v59
    %77 = vmatpush.msra.mxu0 %v58
    %78 = vmatpush.msra.mxu0 %v57
    %79 = vmatpush.msra.mxu0 %v56
    %80 = vmatpush.msra.mxu0 %v55
    %81 = vmatpush.msra.mxu0 %v54
    %82 = vmatpush.msra.mxu0 %v53
    %83 = vmatpush.msra.mxu0 %v52
    %84 = vmatpush.msra.mxu0 %v51
    %85 = vmatpush.msra.mxu0 %v50
    %86 = vmatmul.f32.gmra.mxu0 %v48
    %v87 = vpop.f32.mrf.mxu0
    %v88 = vadd.f32 %v68, %v87
    %89 = vmatmul.f32.gmra.mxu0 %v49
    %v90 = vpop.f32.mrf.mxu0
    %v91 = vadd.f32 %v68, %v90
    %92 = vdwg.mxu0
    %v93 = vmax.f32 %v88, 0.0
    %v94 = vmax.f32 %v91, 0.0
    %v95 = vld [vmem:[%s3] sm:$0xff]
    %v96 = vld [vmem:[%s3 + $0x8] sm:$0xff]
    %v97 = vld [vmem:[%s3 + $0x10] sm:$0xff]
    %v98 = vld [vmem:[%s3 + $0x18] sm:$0xff]
    %v99 = vld [vmem:[%s3 + $0x20] sm:$0xff]
    %v100 = vld [vmem:[%s3 + $0x28] sm:$0xff]
    %v101 = vld [vmem:[%s3 + $0x30] sm:$0xff]
    %v102 = vld [vmem:[%s3 + $0x38] sm:$0xff]
    %v103 = vld [vmem:[%s3 + $0x40] sm:$0xff]
    %v104 = vld [vmem:[%s3 + $0x48] sm:$0xff]
    %v105 = vld [vmem:[%s3 + $0x50] sm:$0xff]
    %v106 = vld [vmem:[%s3 + $0x58] sm:$0xff]
    %v107 = vld [vmem:[%s3 + $0x60] sm:$0xff]
    %v108 = vld [vmem:[%s3 + $0x68] sm:$0xff]
    %v109 = vld [vmem:[%s3 + $0x70] sm:$0xff]
    %v110 = vld [vmem:[%s3 + $0x78] sm:$0xff]
    %v111 = vld [vmem:[%s4] sm:$0x1]
    %v113 = vperm.slane %v111, 0
    %115 = vmatpush.msra.mxu0 %v110
    %116 = vmatpush.msra.mxu0 %v109
    %117 = vmatpush.msra.mxu0 %v108
    %118 = vmatpush.msra.mxu0 %v107
    %119 = vmatpush.msra.mxu0 %v106
    %120 = vmatpush.msra.mxu0 %v105
    %121 = vmatpush.msra.mxu0 %v104
    %122 = vmatpush.msra.mxu0 %v103
    %123 = vmatpush.msra.mxu0 %v102
    %124 = vmatpush.msra.mxu0 %v101
    %125 = vmatpush.msra.mxu0 %v100
    %126 = vmatpush.msra.mxu0 %v99
    %127 = vmatpush.msra.mxu0 %v98
    %128 = vmatpush.msra.mxu0 %v97
    %129 = vmatpush.msra.mxu0 %v96
    %130 = vmatpush.msra.mxu0 %v95
    %131 = vmatmul.f32.gmra.mxu0 %v93
    %v132 = vpop.f32.mrf.mxu0
    %v133 = vadd.f32 %v113, %v132
    %134 = vmatmul.f32.gmra.mxu0 %v94
    %v135 = vpop.f32.mrf.mxu0
    %v136 = vadd.f32 %v113, %v135
    %137 = vdwg.mxu0
    %v138 = vmax.f32 %v133, 0.0
    %v139 = vmax.f32 %v136, 0.0
    %v140 = vld [vmem:[%s5] sm:$0xff]
    %v141 = vld [vmem:[%s5 + $0x8] sm:$0xff]
    %v142 = vld [vmem:[%s5 + $0x10] sm:$0xff]
    %v143 = vld [vmem:[%s5 + $0x18] sm:$0xff]
    %v144 = vld [vmem:[%s5 + $0x20] sm:$0xff]
    %v145 = vld [vmem:[%s5 + $0x28] sm:$0xff]
    %v146 = vld [vmem:[%s5 + $0x30] sm:$0xff]
    %v147 = vld [vmem:[%s5 + $0x38] sm:$0xff]
    %v148 = vld [vmem:[%s5 + $0x40] sm:$0xff]
    %v149 = vld [vmem:[%s5 + $0x48] sm:$0xff]
    %v150 = vld [vmem:[%s5 + $0x50] sm:$0xff]
    %v151 = vld [vmem:[%s5 + $0x58] sm:$0xff]
    %v152 = vld [vmem:[%s5 + $0x60] sm:$0xff]
    %v153 = vld [vmem:[%s5 + $0x68] sm:$0xff]
    %v154 = vld [vmem:[%s5 + $0x70] sm:$0xff]
    %v155 = vld [vmem:[%s5 + $0x78] sm:$0xff]
    %v156 = vld [vmem:[%s6] sm:$0x1]
    %v158 = vperm.slane %v156, 0
    %160 = vmatpush.msra.mxu0 %v155
    %161 = vmatpush.msra.mxu0 %v154
    %162 = vmatpush.msra.mxu0 %v153
    %163 = vmatpush.msra.mxu0 %v152
    %164 = vmatpush.msra.mxu0 %v151
    %165 = vmatpush.msra.mxu0 %v150
    %166 = vmatpush.msra.mxu0 %v149
    %167 = vmatpush.msra.mxu0 %v148
    %168 = vmatpush.msra.mxu0 %v147
    %169 = vmatpush.msra.mxu0 %v146
    %170 = vmatpush.msra.mxu0 %v145
    %171 = vmatpush.msra.mxu0 %v144
    %172 = vmatpush.msra.mxu0 %v143
    %173 = vmatpush.msra.mxu0 %v142
    %174 = vmatpush.msra.mxu0 %v141
    %175 = vmatpush.msra.mxu0 %v140
    %176 = vmatmul.f32.gmra.mxu0 %v138
    %v177 = vpop.f32.mrf.mxu0
    %v178 = vadd.f32 %v158, %v177
    %179 = vmatmul.f32.gmra.mxu0 %v139
    %v180 = vpop.f32.mrf.mxu0
    %v181 = vadd.f32 %v158, %v180
    %182 = vdwg.mxu0
    %v183 = vld [vmem:[%s7] sm:$0xff]
    %v184 = vld [vmem:[%s7 + $0x8] sm:$0xff]
    %v185 = vld [vmem:[%s7 + $0x10] sm:$0xff]
    %v186 = vld [vmem:[%s7 + $0x18] sm:$0xff]
    %v187 = vld [vmem:[%s7 + $0x20] sm:$0xff]
    %v188 = vld [vmem:[%s7 + $0x28] sm:$0xff]
    %v189 = vld [vmem:[%s7 + $0x30] sm:$0xff]
    %v190 = vld [vmem:[%s7 + $0x38] sm:$0xff]
    %v191 = vld [vmem:[%s7 + $0x40] sm:$0xff]
    %v192 = vld [vmem:[%s7 + $0x48] sm:$0xff]
    %v193 = vld [vmem:[%s7 + $0x50] sm:$0xff]
    %v194 = vld [vmem:[%s7 + $0x58] sm:$0xff]
    %v195 = vld [vmem:[%s7 + $0x60] sm:$0xff]
    %v196 = vld [vmem:[%s7 + $0x68] sm:$0xff]
    %v197 = vld [vmem:[%s7 + $0x70] sm:$0xff]
    %v198 = vld [vmem:[%s7 + $0x78] sm:$0xff]
    %v199 = vld [vmem:[%s8] sm:$0x1]
    %v201 = vperm.slane %v199, 0
    %203 = vmatpush.msra.mxu0 %v198
    %204 = vmatpush.msra.mxu0 %v197
    %205 = vmatpush.msra.mxu0 %v196
    %206 = vmatpush.msra.mxu0 %v195
    %207 = vmatpush.msra.mxu0 %v194
    %208 = vmatpush.msra.mxu0 %v193
    %209 = vmatpush.msra.mxu0 %v192
    %210 = vmatpush.msra.mxu0 %v191
    %211 = vmatpush.msra.mxu0 %v190
    %212 = vmatpush.msra.mxu0 %v189
    %213 = vmatpush.msra.mxu0 %v188
    %214 = vmatpush.msra.mxu0 %v187
    %215 = vmatpush.msra.mxu0 %v186
    %216 = vmatpush.msra.mxu0 %v185
    %217 = vmatpush.msra.mxu0 %v184
    %218 = vmatpush.msra.mxu0 %v183
    %219 = vmatmul.f32.gmra.mxu0 %v178
    %v220 = vpop.f32.mrf.mxu0
    %v221 = vadd.f32 %v201, %v220
    %222 = vmatmul.f32.gmra.mxu0 %v181
    %v223 = vpop.f32.mrf.mxu0
    %v224 = vadd.f32 %v201, %v223
    %225 = vdwg.mxu0
    %v226 = vmax.f32 %v221, 0.0
    %v227 = vmax.f32 %v224, 0.0
    %v228 = vld [vmem:[%s9] sm:$0xff]
    %v229 = vld [vmem:[%s9 + $0x8] sm:$0xff]
    %v230 = vld [vmem:[%s9 + $0x10] sm:$0xff]
    %v231 = vld [vmem:[%s9 + $0x18] sm:$0xff]
    %v232 = vld [vmem:[%s9 + $0x20] sm:$0xff]
    %v233 = vld [vmem:[%s9 + $0x28] sm:$0xff]
    %v234 = vld [vmem:[%s9 + $0x30] sm:$0xff]
    %v235 = vld [vmem:[%s9 + $0x38] sm:$0xff]
    %v236 = vld [vmem:[%s9 + $0x40] sm:$0xff]
    %v237 = vld [vmem:[%s9 + $0x48] sm:$0xff]
    %v238 = vld [vmem:[%s9 + $0x50] sm:$0xff]
    %v239 = vld [vmem:[%s9 + $0x58] sm:$0xff]
    %v240 = vld [vmem:[%s9 + $0x60] sm:$0xff]
    %v241 = vld [vmem:[%s9 + $0x68] sm:$0xff]
    %v242 = vld [vmem:[%s9 + $0x70] sm:$0xff]
    %v243 = vld [vmem:[%s9 + $0x78] sm:$0xff]
    %v244 = vld [vmem:[%s10] sm:$0x1]
    %v246 = vperm.slane %v244, 0
    %248 = vmatpush.msra.mxu0 %v243
    %249 = vmatpush.msra.mxu0 %v242
    %250 = vmatpush.msra.mxu0 %v241
    %251 = vmatpush.msra.mxu0 %v240
    %252 = vmatpush.msra.mxu0 %v239
    %253 = vmatpush.msra.mxu0 %v238
    %254 = vmatpush.msra.mxu0 %v237
    %255 = vmatpush.msra.mxu0 %v236
    %256 = vmatpush.msra.mxu0 %v235
    %257 = vmatpush.msra.mxu0 %v234
    %258 = vmatpush.msra.mxu0 %v233
    %259 = vmatpush.msra.mxu0 %v232
    %260 = vmatpush.msra.mxu0 %v231
    %261 = vmatpush.msra.mxu0 %v230
    %262 = vmatpush.msra.mxu0 %v229
    %263 = vmatpush.msra.mxu0 %v228
    %264 = vmatmul.f32.gmra.mxu0 %v226
    %v265 = vpop.f32.mrf.mxu0
    %v266 = vadd.f32 %v246, %v265
    %267 = vmatmul.f32.gmra.mxu0 %v227
    %v268 = vpop.f32.mrf.mxu0
    %v269 = vadd.f32 %v246, %v268
    %270 = vdwg.mxu0
    %v271 = vmax.f32 %v266, 0.0
    %v272 = vmax.f32 %v269, 0.0
    %v273 = vld [vmem:[%s11] sm:$0xff]
    %v274 = vld [vmem:[%s11 + $0x8] sm:$0xff]
    %v275 = vld [vmem:[%s11 + $0x10] sm:$0xff]
    %v276 = vld [vmem:[%s11 + $0x18] sm:$0xff]
    %v277 = vld [vmem:[%s11 + $0x20] sm:$0xff]
    %v278 = vld [vmem:[%s11 + $0x28] sm:$0xff]
    %v279 = vld [vmem:[%s11 + $0x30] sm:$0xff]
    %v280 = vld [vmem:[%s11 + $0x38] sm:$0xff]
    %v281 = vld [vmem:[%s11 + $0x40] sm:$0xff]
    %v282 = vld [vmem:[%s11 + $0x48] sm:$0xff]
    %v283 = vld [vmem:[%s11 + $0x50] sm:$0xff]
    %v284 = vld [vmem:[%s11 + $0x58] sm:$0xff]
    %v285 = vld [vmem:[%s11 + $0x60] sm:$0xff]
    %v286 = vld [vmem:[%s11 + $0x68] sm:$0xff]
    %v287 = vld [vmem:[%s11 + $0x70] sm:$0xff]
    %v288 = vld [vmem:[%s11 + $0x78] sm:$0xff]
    %v289 = vld [vmem:[%s12] sm:$0x1]
    %v291 = vperm.slane %v289, 0
    %293 = vmatpush.msra.mxu0 %v288
    %294 = vmatpush.msra.mxu0 %v287
    %295 = vmatpush.msra.mxu0 %v286
    %296 = vmatpush.msra.mxu0 %v285
    %297 = vmatpush.msra.mxu0 %v284
    %298 = vmatpush.msra.mxu0 %v283
    %299 = vmatpush.msra.mxu0 %v282
    %300 = vmatpush.msra.mxu0 %v281
    %301 = vmatpush.msra.mxu0 %v280
    %302 = vmatpush.msra.mxu0 %v279
    %303 = vmatpush.msra.mxu0 %v278
    %304 = vmatpush.msra.mxu0 %v277
    %305 = vmatpush.msra.mxu0 %v276
    %306 = vmatpush.msra.mxu0 %v275
    %307 = vmatpush.msra.mxu0 %v274
    %308 = vmatpush.msra.mxu0 %v273
    %309 = vmatmul.f32.gmra.mxu0 %v271
    %v310 = vpop.f32.mrf.mxu0
    %v311 = vadd.f32 %v291, %v310
    %312 = vmatmul.f32.gmra.mxu0 %v272
    %v313 = vpop.f32.mrf.mxu0
    %v314 = vadd.f32 %v291, %v313
    %315 = vdwg.mxu0
    %316 = vst [vmem:[#allocation2] sm:$0xff] %v311
    %317 = vst [vmem:[#allocation2 + $0x8] sm:$0xff] %v314
    %318 = vst [vmem:[#allocation4] sm:$0xff] %v178
    %319 = vst [vmem:[#allocation4 + $0x8] sm:$0xff] %v181
    // Predicated region
    $region54: #{ae_forward.1} parent=1 // pred_check
      _
    $region55: #{ae_forward.1} parent=1 // pred_check_branch
      %321 = sbr.rel (0) target = $region57
    $region56: #{ae_forward.1} parent=1 // pred_region
      %323 = vsyncadd [#allocation3], 0
      %s324 = sshll.u32 [#allocation2], 4
      %s325 = int_to_ptr.vmem [resolvable:$true] %s324
      %s326 = sshll.u32 %s13, 4
      %s327 = int_to_ptr.hbm [resolvable:$true] %s326
      %332 = dma.vmem_to_hbm [thread:$0]  %s325, 256, %s327, [#allocation3], 128, 128, 8
    $region57: #{ae_forward.1} parent=1 // pred_fallthru
      _
    // Predicated region
    $region58: #{ae_forward.1} parent=1 // pred_check
      _
    $region59: #{ae_forward.1} parent=1 // pred_check_branch
      %334 = sbr.rel (0) target = $region61
    $region60: #{ae_forward.1} parent=1 // pred_region
      %336 = vsyncadd [#allocation5], 0
      %s337 = sshll.u32 [#allocation4], 4
      %s338 = int_to_ptr.vmem [resolvable:$true] %s337
      %s339 = sshll.u32 %s14, 4
      %s340 = int_to_ptr.hbm [resolvable:$true] %s339
      %345 = dma.vmem_to_hbm [thread:$0]  %s338, 256, %s340, [#allocation5], 128, 128, 8
    $region61: #{ae_forward.1} parent=1 // pred_fallthru
      _
    // Predicated region
    $region62: #{ae_forward.1} parent=1 // pred_check
      _
    $region63: #{ae_forward.1} parent=1 // pred_check_branch
      %347 = sbr.rel (0) target = $region65
    $region64: #{ae_forward.1} parent=1 // pred_region
      %349 = dma.done [#allocation3], 256
    $region65: #{ae_forward.1} parent=1 // pred_fallthru
      _
    // Predicated region
    $region66: #{ae_forward.1} parent=1 // pred_check
      _
    $region67: #{ae_forward.1} parent=1 // pred_check_branch
      %351 = sbr.rel (0) target = $region69
    $region68: #{ae_forward.1} parent=1 // pred_region
      %353 = dma.done [#allocation5], 256
    $region69: #{ae_forward.1} parent=1 // pred_fallthru
      _
    %354 = vsyncpa [#allocation3], 1
    %355 = vsyncpa [#allocation5], 1

// kernel: ae_forward.1
$region0: #{ae_forward.1}
  #allocation0 [shape = 'u32[]', space=smem, size = 0x4, offset = 0x4, fixed_abs, tag = 'smem constant byte address 0x4 - core index']
  #allocation1 [shape = 'u32[72,128]{1,0:T(1,128)}', space=vmem, size = 0x9000, scoped, tag = 'internal scratch']
  %s0 = inlined_call_operand.vmem [shape: f32[16,128], index: 0, kind: input, shape index: {}]
  %s1 = inlined_call_operand.vmem [shape: f32[128,128], index: 1, kind: input, shape index: {}]
  %s2 = inlined_call_operand.vmem [shape: f32[1,128], index: 2, kind: input, shape index: {}]
  %s3 = inlined_call_operand.vmem [shape: f32[128,128], index: 3, kind: input, shape index: {}]
  %s4 = inlined_call_operand.vmem [shape: f32[1,128], index: 4, kind: input, shape index: {}]
  %s5 = inlined_call_operand.vmem [shape: f32[128,128], index: 5, kind: input, shape index: {}]
  %s6 = inlined_call_operand.vmem [shape: f32[1,128], index: 6, kind: input, shape index: {}]
  %s7 = inlined_call_operand.vmem [shape: f32[128,128], index: 7, kind: input, shape index: {}]
  %s8 = inlined_call_operand.vmem [shape: f32[1,128], index: 8, kind: input, shape index: {}]
  %s9 = inlined_call_operand.vmem [shape: f32[128,128], index: 9, kind: input, shape index: {}]
  %s10 = inlined_call_operand.vmem [shape: f32[1,128], index: 10, kind: input, shape index: {}]
  %s11 = inlined_call_operand.vmem [shape: f32[128,128], index: 11, kind: input, shape index: {}]
  %s12 = inlined_call_operand.vmem [shape: f32[1,128], index: 12, kind: input, shape index: {}]
  %s13 = inlined_call_operand.hbm [shape: f32[16,128], index: 13, kind: output, shape index: {0}]
  %s14 = inlined_call_operand.hbm [shape: f32[16,128], index: 14, kind: output, shape index: {1}]
  %15 = xla_tuple %s13, %s14
  %s16 = sld [smem:[#allocation0]]
  $region70: #{ae_forward.1} parent=0
    _
  %s18 = ssub.s32 1, %s16
  %s19 = scalar_select 0, %s18, %s16
  $region1: #{ae_forward.1} parent=0
    #allocation2 [shape = 'u8[8192]{0}', space=vmem, size = 0x2000, scoped, tag = 'output window, operand 0, single buffered']
    #allocation3 [shape = 's32[1]{0}', space=sflag, size = 0x4, scoped, tag = 'scoped memory for ae_forward.1']
    #allocation4 [shape = 'u8[8192]{0}', space=vmem, size = 0x2000, scoped, tag = 'output window, operand 1, single buffered']
    #allocation5 [shape = 's32[1]{0}', space=sflag, size = 0x4, scoped, tag = 'scoped memory for ae_forward.1']
    %20 = vsyncpa [#allocation3], 0
    %21 = vsyncpa [#allocation5], 0
    // Predicated region
    $region2: #{ae_forward.1} parent=1 // pred_check
      _
    $region3: #{ae_forward.1} parent=1 // pred_check_branch
      %23 = sbr.rel (0) target = $region5
    $region4: #{ae_forward.1} parent=1 // pred_region
      _
    $region5: #{ae_forward.1} parent=1 // pred_fallthru
      _
    // Predicated region
    $region6: #{ae_forward.1} parent=1 // pred_check
      _
    $region7: #{ae_forward.1} parent=1 // pred_check_branch
      %25 = sbr.rel (0) target = $region9
    $region8: #{ae_forward.1} parent=1 // pred_region
      _
    $region9: #{ae_forward.1} parent=1 // pred_fallthru
      _
    // Predicated region
    $region10: #{ae_forward.1} parent=1 // pred_check
      _
    $region11: #{ae_forward.1} parent=1 // pred_check_branch
      %27 = sbr.rel (0) target = $region13
    $region12: #{ae_forward.1} parent=1 // pred_region
      _
    $region13: #{ae_forward.1} parent=1 // pred_fallthru
      _
    // Predicated region
    $region14: #{ae_forward.1} parent=1 // pred_check
      _
    $region15: #{ae_forward.1} parent=1 // pred_check_branch
      %29 = sbr.rel (0) target = $region17
    $region16: #{ae_forward.1} parent=1 // pred_region
      _
    $region17: #{ae_forward.1} parent=1 // pred_fallthru
      _
    // Predicated region
    $region18: #{ae_forward.1} parent=1 // pred_check
      _
    $region19: #{ae_forward.1} parent=1 // pred_check_branch
      %31 = sbr.rel (0) target = $region21
    $region20: #{ae_forward.1} parent=1 // pred_region
      _
    $region21: #{ae_forward.1} parent=1 // pred_fallthru
      _
    // Predicated region
    $region22: #{ae_forward.1} parent=1 // pred_check
      _
    $region23: #{ae_forward.1} parent=1 // pred_check_branch
      %33 = sbr.rel (0) target = $region25
    $region24: #{ae_forward.1} parent=1 // pred_region
      _
    $region25: #{ae_forward.1} parent=1 // pred_fallthru
      _
    // Predicated region
    $region26: #{ae_forward.1} parent=1 // pred_check
      _
    $region27: #{ae_forward.1} parent=1 // pred_check_branch
      %35 = sbr.rel (0) target = $region29
    $region28: #{ae_forward.1} parent=1 // pred_region
      _
    $region29: #{ae_forward.1} parent=1 // pred_fallthru
      _
    // Predicated region
    $region30: #{ae_forward.1} parent=1 // pred_check
      _
    $region31: #{ae_forward.1} parent=1 // pred_check_branch
      %37 = sbr.rel (0) target = $region33
    $region32: #{ae_forward.1} parent=1 // pred_region
      _
    $region33: #{ae_forward.1} parent=1 // pred_fallthru
      _
    // Predicated region
    $region34: #{ae_forward.1} parent=1 // pred_check
      _
    $region35: #{ae_forward.1} parent=1 // pred_check_branch
      %39 = sbr.rel (0) target = $region37
    $region36: #{ae_forward.1} parent=1 // pred_region
      _
    $region37: #{ae_forward.1} parent=1 // pred_fallthru
      _
    // Predicated region
    $region38: #{ae_forward.1} parent=1 // pred_check
      _
    $region39: #{ae_forward.1} parent=1 // pred_check_branch
      %41 = sbr.rel (0) target = $region41
    $region40: #{ae_forward.1} parent=1 // pred_region
      _
    $region41: #{ae_forward.1} parent=1 // pred_fallthru
      _
    // Predicated region
    $region42: #{ae_forward.1} parent=1 // pred_check
      _
    $region43: #{ae_forward.1} parent=1 // pred_check_branch
      %43 = sbr.rel (0) target = $region45
    $region44: #{ae_forward.1} parent=1 // pred_region
      _
    $region45: #{ae_forward.1} parent=1 // pred_fallthru
      _
    // Predicated region
    $region46: #{ae_forward.1} parent=1 // pred_check
      _
    $region47: #{ae_forward.1} parent=1 // pred_check_branch
      %45 = sbr.rel (0) target = $region49
    $region48: #{ae_forward.1} parent=1 // pred_region
      _
    $region49: #{ae_forward.1} parent=1 // pred_fallthru
      _
    // Predicated region
    $region50: #{ae_forward.1} parent=1 // pred_check
      _
    $region51: #{ae_forward.1} parent=1 // pred_check_branch
      %47 = sbr.rel (0) target = $region53
    $region52: #{ae_forward.1} parent=1 // pred_region
      _
    $region53: #{ae_forward.1} parent=1 // pred_fallthru
      _
    %v48 = vld [vmem:[%s0] sm:$0xff]
    %v49 = vld [vmem:[%s0 + $0x8] sm:$0xff]
    %v50 = vld [vmem:[%s1] sm:$0xff]
    %v51 = vld [vmem:[%s1 + $0x8] sm:$0xff]
    %v52 = vld [vmem:[%s1 + $0x10] sm:$0xff]
    %v53 = vld [vmem:[%s1 + $0x18] sm:$0xff]
    %v54 = vld [vmem:[%s1 + $0x20] sm:$0xff]
    %v55 = vld [vmem:[%s1 + $0x28] sm:$0xff]
    %v56 = vld [vmem:[%s1 + $0x30] sm:$0xff]
    %v57 = vld [vmem:[%s1 + $0x38] sm:$0xff]
    %v58 = vld [vmem:[%s1 + $0x40] sm:$0xff]
    %v59 = vld [vmem:[%s1 + $0x48] sm:$0xff]
    %v60 = vld [vmem:[%s1 + $0x50] sm:$0xff]
    %v61 = vld [vmem:[%s1 + $0x58] sm:$0xff]
    %v62 = vld [vmem:[%s1 + $0x60] sm:$0xff]
    %v63 = vld [vmem:[%s1 + $0x68] sm:$0xff]
    %v64 = vld [vmem:[%s1 + $0x70] sm:$0xff]
    %v65 = vld [vmem:[%s1 + $0x78] sm:$0xff]
    %v66 = vld [vmem:[%s2] sm:$0x1]
    %v68 = vperm.slane %v66, 0
    %70 = vmatpush.msra.mxu0 %v65
    %71 = vmatpush.msra.mxu0 %v64
    %72 = vmatpush.msra.mxu0 %v63
    %73 = vmatpush.msra.mxu0 %v62
    %74 = vmatpush.msra.mxu0 %v61
    %75 = vmatpush.msra.mxu0 %v60
    %76 = vmatpush.msra.mxu0 %v59
    %77 = vmatpush.msra.mxu0 %v58
    %78 = vmatpush.msra.mxu0 %v57
    %79 = vmatpush.msra.mxu0 %v56
    %80 = vmatpush.msra.mxu0 %v55
    %81 = vmatpush.msra.mxu0 %v54
    %82 = vmatpush.msra.mxu0 %v53
    %83 = vmatpush.msra.mxu0 %v52
    %84 = vmatpush.msra.mxu0 %v51
    %85 = vmatpush.msra.mxu0 %v50
    %86 = vmatmul.f32.gmra.mxu0 %v48
    %v87 = vpop.f32.mrf.mxu0
    %v88 = vadd.f32 %v68, %v87
    %89 = vmatmul.f32.gmra.mxu0 %v49
    %v90 = vpop.f32.mrf.mxu0
    %v91 = vadd.f32 %v68, %v90
    %92 = vdwg.mxu0
    %v93 = vmax.f32 %v88, 0.0
    %v94 = vmax.f32 %v91, 0.0
    %v95 = vld [vmem:[%s3] sm:$0xff]
    %v96 = vld [vmem:[%s3 + $0x8] sm:$0xff]
    %v97 = vld [vmem:[%s3 + $0x10] sm:$0xff]
    %v98 = vld [vmem:[%s3 + $0x18] sm:$0xff]
    %v99 = vld [vmem:[%s3 + $0x20] sm:$0xff]
    %v100 = vld [vmem:[%s3 + $0x28] sm:$0xff]
    %v101 = vld [vmem:[%s3 + $0x30] sm:$0xff]
    %v102 = vld [vmem:[%s3 + $0x38] sm:$0xff]
    %v103 = vld [vmem:[%s3 + $0x40] sm:$0xff]
    %v104 = vld [vmem:[%s3 + $0x48] sm:$0xff]
    %v105 = vld [vmem:[%s3 + $0x50] sm:$0xff]
    %v106 = vld [vmem:[%s3 + $0x58] sm:$0xff]
    %v107 = vld [vmem:[%s3 + $0x60] sm:$0xff]
    %v108 = vld [vmem:[%s3 + $0x68] sm:$0xff]
    %v109 = vld [vmem:[%s3 + $0x70] sm:$0xff]
    %v110 = vld [vmem:[%s3 + $0x78] sm:$0xff]
    %v111 = vld [vmem:[%s4] sm:$0x1]
    %v113 = vperm.slane %v111, 0
    %115 = vmatpush.msra.mxu0 %v110
    %116 = vmatpush.msra.mxu0 %v109
    %117 = vmatpush.msra.mxu0 %v108
    %118 = vmatpush.msra.mxu0 %v107
    %119 = vmatpush.msra.mxu0 %v106
    %120 = vmatpush.msra.mxu0 %v105
    %121 = vmatpush.msra.mxu0 %v104
    %122 = vmatpush.msra.mxu0 %v103
    %123 = vmatpush.msra.mxu0 %v102
    %124 = vmatpush.msra.mxu0 %v101
    %125 = vmatpush.msra.mxu0 %v100
    %126 = vmatpush.msra.mxu0 %v99
    %127 = vmatpush.msra.mxu0 %v98
    %128 = vmatpush.msra.mxu0 %v97
    %129 = vmatpush.msra.mxu0 %v96
    %130 = vmatpush.msra.mxu0 %v95
    %131 = vmatmul.f32.gmra.mxu0 %v93
    %v132 = vpop.f32.mrf.mxu0
    %v133 = vadd.f32 %v113, %v132
    %134 = vmatmul.f32.gmra.mxu0 %v94
    %v135 = vpop.f32.mrf.mxu0
    %v136 = vadd.f32 %v113, %v135
    %137 = vdwg.mxu0
    %v138 = vmax.f32 %v133, 0.0
    %v139 = vmax.f32 %v136, 0.0
    %v140 = vld [vmem:[%s5] sm:$0xff]
    %v141 = vld [vmem:[%s5 + $0x8] sm:$0xff]
    %v142 = vld [vmem:[%s5 + $0x10] sm:$0xff]
    %v143 = vld [vmem:[%s5 + $0x18] sm:$0xff]
    %v144 = vld [vmem:[%s5 + $0x20] sm:$0xff]
    %v145 = vld [vmem:[%s5 + $0x28] sm:$0xff]
    %v146 = vld [vmem:[%s5 + $0x30] sm:$0xff]
    %v147 = vld [vmem:[%s5 + $0x38] sm:$0xff]
    %v148 = vld [vmem:[%s5 + $0x40] sm:$0xff]
    %v149 = vld [vmem:[%s5 + $0x48] sm:$0xff]
    %v150 = vld [vmem:[%s5 + $0x50] sm:$0xff]
    %v151 = vld [vmem:[%s5 + $0x58] sm:$0xff]
    %v152 = vld [vmem:[%s5 + $0x60] sm:$0xff]
    %v153 = vld [vmem:[%s5 + $0x68] sm:$0xff]
    %v154 = vld [vmem:[%s5 + $0x70] sm:$0xff]
    %v155 = vld [vmem:[%s5 + $0x78] sm:$0xff]
    %v156 = vld [vmem:[%s6] sm:$0x1]
    %v158 = vperm.slane %v156, 0
    %160 = vmatpush.msra.mxu0 %v155
    %161 = vmatpush.msra.mxu0 %v154
    %162 = vmatpush.msra.mxu0 %v153
    %163 = vmatpush.msra.mxu0 %v152
    %164 = vmatpush.msra.mxu0 %v151
    %165 = vmatpush.msra.mxu0 %v150
    %166 = vmatpush.msra.mxu0 %v149
    %167 = vmatpush.msra.mxu0 %v148
    %168 = vmatpush.msra.mxu0 %v147
    %169 = vmatpush.msra.mxu0 %v146
    %170 = vmatpush.msra.mxu0 %v145
    %171 = vmatpush.msra.mxu0 %v144
    %172 = vmatpush.msra.mxu0 %v143
    %173 = vmatpush.msra.mxu0 %v142
    %174 = vmatpush.msra.mxu0 %v141
    %175 = vmatpush.msra.mxu0 %v140
    %176 = vmatmul.f32.gmra.mxu0 %v138
    %v177 = vpop.f32.mrf.mxu0
    %v178 = vadd.f32 %v158, %v177
    %179 = vmatmul.f32.gmra.mxu0 %v139
    %v180 = vpop.f32.mrf.mxu0
    %v181 = vadd.f32 %v158, %v180
    %182 = vdwg.mxu0
    %v183 = vld [vmem:[%s7] sm:$0xff]
    %v184 = vld [vmem:[%s7 + $0x8] sm:$0xff]
    %v185 = vld [vmem:[%s7 + $0x10] sm:$0xff]
    %v186 = vld [vmem:[%s7 + $0x18] sm:$0xff]
    %v187 = vld [vmem:[%s7 + $0x20] sm:$0xff]
    %v188 = vld [vmem:[%s7 + $0x28] sm:$0xff]
    %v189 = vld [vmem:[%s7 + $0x30] sm:$0xff]
    %v190 = vld [vmem:[%s7 + $0x38] sm:$0xff]
    %v191 = vld [vmem:[%s7 + $0x40] sm:$0xff]
    %v192 = vld [vmem:[%s7 + $0x48] sm:$0xff]
    %v193 = vld [vmem:[%s7 + $0x50] sm:$0xff]
    %v194 = vld [vmem:[%s7 + $0x58] sm:$0xff]
    %v195 = vld [vmem:[%s7 + $0x60] sm:$0xff]
    %v196 = vld [vmem:[%s7 + $0x68] sm:$0xff]
    %v197 = vld [vmem:[%s7 + $0x70] sm:$0xff]
    %v198 = vld [vmem:[%s7 + $0x78] sm:$0xff]
    %v199 = vld [vmem:[%s8] sm:$0x1]
    %v201 = vperm.slane %v199, 0
    %203 = vmatpush.msra.mxu0 %v198
    %204 = vmatpush.msra.mxu0 %v197
    %205 = vmatpush.msra.mxu0 %v196
    %206 = vmatpush.msra.mxu0 %v195
    %207 = vmatpush.msra.mxu0 %v194
    %208 = vmatpush.msra.mxu0 %v193
    %209 = vmatpush.msra.mxu0 %v192
    %210 = vmatpush.msra.mxu0 %v191
    %211 = vmatpush.msra.mxu0 %v190
    %212 = vmatpush.msra.mxu0 %v189
    %213 = vmatpush.msra.mxu0 %v188
    %214 = vmatpush.msra.mxu0 %v187
    %215 = vmatpush.msra.mxu0 %v186
    %216 = vmatpush.msra.mxu0 %v185
    %217 = vmatpush.msra.mxu0 %v184
    %218 = vmatpush.msra.mxu0 %v183
    %219 = vmatmul.f32.gmra.mxu0 %v178
    %v220 = vpop.f32.mrf.mxu0
    %v221 = vadd.f32 %v201, %v220
    %222 = vmatmul.f32.gmra.mxu0 %v181
    %v223 = vpop.f32.mrf.mxu0
    %v224 = vadd.f32 %v201, %v223
    %225 = vdwg.mxu0
    %v226 = vmax.f32 %v221, 0.0
    %v227 = vmax.f32 %v224, 0.0
    %v228 = vld [vmem:[%s9] sm:$0xff]
    %v229 = vld [vmem:[%s9 + $0x8] sm:$0xff]
    %v230 = vld [vmem:[%s9 + $0x10] sm:$0xff]
    %v231 = vld [vmem:[%s9 + $0x18] sm:$0xff]
    %v232 = vld [vmem:[%s9 + $0x20] sm:$0xff]
    %v233 = vld [vmem:[%s9 + $0x28] sm:$0xff]
    %v234 = vld [vmem:[%s9 + $0x30] sm:$0xff]
    %v235 = vld [vmem:[%s9 + $0x38] sm:$0xff]
    %v236 = vld [vmem:[%s9 + $0x40] sm:$0xff]
    %v237 = vld [vmem:[%s9 + $0x48] sm:$0xff]
    %v238 = vld [vmem:[%s9 + $0x50] sm:$0xff]
    %v239 = vld [vmem:[%s9 + $0x58] sm:$0xff]
    %v240 = vld [vmem:[%s9 + $0x60] sm:$0xff]
    %v241 = vld [vmem:[%s9 + $0x68] sm:$0xff]
    %v242 = vld [vmem:[%s9 + $0x70] sm:$0xff]
    %v243 = vld [vmem:[%s9 + $0x78] sm:$0xff]
    %v244 = vld [vmem:[%s10] sm:$0x1]
    %v246 = vperm.slane %v244, 0
    %248 = vmatpush.msra.mxu0 %v243
    %249 = vmatpush.msra.mxu0 %v242
    %250 = vmatpush.msra.mxu0 %v241
    %251 = vmatpush.msra.mxu0 %v240
    %252 = vmatpush.msra.mxu0 %v239
    %253 = vmatpush.msra.mxu0 %v238
    %254 = vmatpush.msra.mxu0 %v237
    %255 = vmatpush.msra.mxu0 %v236
    %256 = vmatpush.msra.mxu0 %v235
    %257 = vmatpush.msra.mxu0 %v234
    %258 = vmatpush.msra.mxu0 %v233
    %259 = vmatpush.msra.mxu0 %v232
    %260 = vmatpush.msra.mxu0 %v231
    %261 = vmatpush.msra.mxu0 %v230
    %262 = vmatpush.msra.mxu0 %v229
    %263 = vmatpush.msra.mxu0 %v228
    %264 = vmatmul.f32.gmra.mxu0 %v226
    %v265 = vpop.f32.mrf.mxu0
    %v266 = vadd.f32 %v246, %v265
    %267 = vmatmul.f32.gmra.mxu0 %v227
    %v268 = vpop.f32.mrf.mxu0
    %v269 = vadd.f32 %v246, %v268
    %270 = vdwg.mxu0
    %v271 = vmax.f32 %v266, 0.0
    %v272 = vmax.f32 %v269, 0.0
    %v273 = vld [vmem:[%s11] sm:$0xff]
    %v274 = vld [vmem:[%s11 + $0x8] sm:$0xff]
    %v275 = vld [vmem:[%s11 + $0x10] sm:$0xff]
    %v276 = vld [vmem:[%s11 + $0x18] sm:$0xff]
    %v277 = vld [vmem:[%s11 + $0x20] sm:$0xff]
    %v278 = vld [vmem:[%s11 + $0x28] sm:$0xff]
    %v279 = vld [vmem:[%s11 + $0x30] sm:$0xff]
    %v280 = vld [vmem:[%s11 + $0x38] sm:$0xff]
    %v281 = vld [vmem:[%s11 + $0x40] sm:$0xff]
    %v282 = vld [vmem:[%s11 + $0x48] sm:$0xff]
    %v283 = vld [vmem:[%s11 + $0x50] sm:$0xff]
    %v284 = vld [vmem:[%s11 + $0x58] sm:$0xff]
    %v285 = vld [vmem:[%s11 + $0x60] sm:$0xff]
    %v286 = vld [vmem:[%s11 + $0x68] sm:$0xff]
    %v287 = vld [vmem:[%s11 + $0x70] sm:$0xff]
    %v288 = vld [vmem:[%s11 + $0x78] sm:$0xff]
    %v289 = vld [vmem:[%s12] sm:$0x1]
    %v291 = vperm.slane %v289, 0
    %293 = vmatpush.msra.mxu0 %v288
    %294 = vmatpush.msra.mxu0 %v287
    %295 = vmatpush.msra.mxu0 %v286
    %296 = vmatpush.msra.mxu0 %v285
    %297 = vmatpush.msra.mxu0 %v284
    %298 = vmatpush.msra.mxu0 %v283
    %299 = vmatpush.msra.mxu0 %v282
    %300 = vmatpush.msra.mxu0 %v281
    %301 = vmatpush.msra.mxu0 %v280
    %302 = vmatpush.msra.mxu0 %v279
    %303 = vmatpush.msra.mxu0 %v278
    %304 = vmatpush.msra.mxu0 %v277
    %305 = vmatpush.msra.mxu0 %v276
    %306 = vmatpush.msra.mxu0 %v275
    %307 = vmatpush.msra.mxu0 %v274
    %308 = vmatpush.msra.mxu0 %v273
    %309 = vmatmul.f32.gmra.mxu0 %v271
    %v310 = vpop.f32.mrf.mxu0
    %v311 = vadd.f32 %v291, %v310
    %312 = vmatmul.f32.gmra.mxu0 %v272
    %v313 = vpop.f32.mrf.mxu0
    %v314 = vadd.f32 %v291, %v313
    %315 = vdwg.mxu0
    %316 = vst [vmem:[#allocation2] sm:$0xff] %v311
    %317 = vst [vmem:[#allocation2 + $0x8] sm:$0xff] %v314
    %318 = vst [vmem:[#allocation4] sm:$0xff] %v178
    %319 = vst [vmem:[#allocation4 + $0x8] sm:$0xff] %v181
    // Predicated region
    $region54: #{ae_forward.1} parent=1 // pred_check
      _
    $region55: #{ae_forward.1} parent=1 // pred_check_branch
      %321 = sbr.rel (0) target = $region57
    $region56: #{ae_forward.1} parent=1 // pred_region
      %323 = vsyncadd [#allocation3], 0
      %s324 = sshll.u32 [#allocation2], 4
      %s325 = int_to_ptr.vmem [resolvable:$true] %s324
      %s326 = sshll.u32 %s13, 4
      %s327 = int_to_ptr.hbm [resolvable:$true] %s326
      %332 = dma.vmem_to_hbm [thread:$0]  %s325, 256, %s327, [#allocation3], 128, 128, 8
    $region57: #{ae_forward.1} parent=1 // pred_fallthru
      _
    // Predicated region
    $region58: #{ae_forward.1} parent=1 // pred_check
      _
    $region59: #{ae_forward.1} parent=1 // pred_check_branch
      %334 = sbr.rel (0) target = $region61
    $region60: #{ae_forward.1} parent=1 // pred_region
      %336 = vsyncadd [#allocation5], 0
      %s337 = sshll.u32 [#allocation4], 4
      %s338 = int_to_ptr.vmem [resolvable:$true] %s337
      %s339 = sshll.u32 %s14, 4
      %s340 = int_to_ptr.hbm [resolvable:$true] %s339
      %345 = dma.vmem_to_hbm [thread:$0]  %s338, 256, %s340, [#allocation5], 128, 128, 8
    $region61: #{ae_forward.1} parent=1 // pred_fallthru
      _
    // Predicated region
    $region62: #{ae_forward.1} parent=1 // pred_check
      _
    $region63: #{ae_forward.1} parent=1 // pred_check_branch
      %347 = sbr.rel (0) target = $region65
    $region64: #{ae_forward.1} parent=1 // pred_region
      %349 = dma.done [#allocation3], 256
    $region65: #{ae_forward.1} parent=1 // pred_fallthru
      _
    // Predicated region
    $region66: #{ae_forward.1} parent=1 // pred_check
      _
    $region67: #{ae_forward.1} parent=1 // pred_check_branch
      %351 = sbr.rel (0) target = $region69
    $region68: #{ae_forward.1} parent=1 // pred_region
      %353 = dma.done [#allocation5], 256
    $region69: #{ae_forward.1} parent=1 // pred_fallthru
      _
    %354 = vsyncpa [#allocation3], 1
    %355 = vsyncpa [#allocation5], 1

</llo_original>
